<compile_context>
chip_gen: v7x
topology: tpu7x:2x2x1
jax: 0.10.0
libtpu: 0.0.40
codegen_flags: <defaults>
</compile_context>

<pallas_src>
import functools

import jax
import jax.numpy as jnp
from jax.experimental import pallas as pl
from jax.experimental.pallas import tpu as pltpu


def _actor_kernel(x_ref, w1_ref, b1_ref, w2_ref, b2_ref, o_ref, *, action_bound):
    # x: (TB, S)   w1: (S, H)   b1: (1, H)   w2: (H, A)   b2: (1, A)
    x = x_ref[...]
    # Layer 1: Linear + ReLU (MXU matmul, f32 accumulation)
    h = jnp.dot(x, w1_ref[...], preferred_element_type=jnp.float32) + b1_ref[...]
    h = jnp.maximum(h, 0.0)
    # Layer 2: Linear + Tanh, then scale by the (static) action bound
    a = jnp.dot(h, w2_ref[...], preferred_element_type=jnp.float32) + b2_ref[...]
    o_ref[...] = (jnp.tanh(a) * action_bound).astype(o_ref.dtype)


def actor_net_forward(states, w1, b1, w2, b2, action_bound, *, block_b=256):
    """states: (B, state_dim) f32 -> (B, action_dim) f32.

    Weights are stored transposed relative to PyTorch (in_features, out_features),
    so the kernel does plain x @ W + b. `action_bound` must be a static Python
    scalar (it is baked into the compiled kernel).
    """
    B, S = states.shape
    H = w1.shape[1]
    A = w2.shape[1]

    bound = float(action_bound)
    kernel = functools.partial(_actor_kernel, action_bound=bound)

    b1_2d = jnp.asarray(b1, jnp.float32).reshape(1, H)
    b2_2d = jnp.asarray(b2, jnp.float32).reshape(1, A)

    if B <= block_b:
        # Tiny problem: single invocation, no grid, everything resident in VMEM.
        vmem = pltpu.MemorySpace.VMEM
        return pl.pallas_call(
            kernel,
            out_shape=jax.ShapeDtypeStruct((B, A), jnp.float32),
            in_specs=[pl.BlockSpec(memory_space=vmem)] * 5,
            out_specs=pl.BlockSpec(memory_space=vmem),
        )(states, w1, b1_2d, w2, b2_2d)

    # Batched path: tile over B, weights/biases resident across the whole grid.
    pad = (-B) % block_b
    x = jnp.pad(states, ((0, pad), (0, 0))) if pad else states
    bp = B + pad
    out = pl.pallas_call(
        kernel,
        out_shape=jax.ShapeDtypeStruct((bp, A), jnp.float32),
        grid=(bp // block_b,),
        in_specs=[
            pl.BlockSpec((block_b, S), lambda i: (i, 0)),  # x streams over batch
            pl.BlockSpec((S, H), lambda i: (0, 0)),        # w1 resident
            pl.BlockSpec((1, H), lambda i: (0, 0)),        # b1 resident
            pl.BlockSpec((H, A), lambda i: (0, 0)),        # w2 resident
            pl.BlockSpec((1, A), lambda i: (0, 0)),        # b2 resident
        ],
        out_specs=pl.BlockSpec((block_b, A), lambda i: (i, 0)),
        compiler_params=pltpu.CompilerParams(
            dimension_semantics=("parallel",),  # v7x: shard batch over 2 TCs
        ),
    )(x, w1, b1_2d, w2, b2_2d)
    return out[:B] if pad else out


def init_params(key, state_dim, action_dim, num_hiddens=300, lane_align=128):
    """Matches the PyTorch module: weights ~ Normal(0, 0.001), biases = 0.

    The hidden dimension is zero-padded up to a multiple of `lane_align`
    (300 -> 384): the extra hidden units have zero in-weights, zero bias and
    zero out-weights, so the forward pass is numerically identical to the
    unpadded 300-unit network while giving clean (…,128k) lane tiling.
    """
    k1, k2 = jax.random.split(key)
    w1 = 0.001 * jax.random.normal(k1, (state_dim, num_hiddens), dtype=jnp.float32)
    b1 = jnp.zeros((num_hiddens,), dtype=jnp.float32)
    w2 = 0.001 * jax.random.normal(k2, (num_hiddens, action_dim), dtype=jnp.float32)
    b2 = jnp.zeros((action_dim,), dtype=jnp.float32)
    pad = (-num_hiddens) % lane_align
    if pad:
        w1 = jnp.pad(w1, ((0, 0), (0, pad)))
        b1 = jnp.pad(b1, ((0, pad),))
        w2 = jnp.pad(w2, ((0, pad), (0, 0)))
    return w1, b1, w2, b2


if __name__ == "__main__":
    key = jax.random.PRNGKey(0)
    k_params, k_x, k_big = jax.random.split(key, 3)

    # Small shapes consistent with the module's forward.
    batch = 2
    state_dim = 16
    action_dim = 4
    action_bound_high = 2.0  # corresponds to action_bound[1] in the module

    w1, b1, w2, b2 = init_params(k_params, state_dim, action_dim)
    states = jax.random.normal(k_x, (batch, state_dim), dtype=jnp.float32)

    def ref_fwd(x, a1, c1, a2, c2):
        return jnp.tanh(jnp.maximum(x @ a1 + c1, 0.0) @ a2 + c2) * action_bound_high

    # 1) Module-faithful init (std=0.001): grid-less VMEM-resident path.
    out = jax.block_until_ready(
        actor_net_forward(states, w1, b1, w2, b2, action_bound_high)
    )
    assert out.shape == (batch, action_dim)
    assert jnp.allclose(out, ref_fwd(states, w1, b1, w2, b2), atol=1e-5, rtol=1e-5)

    # 2) Moderate-scale weights so ReLU/Tanh are exercised at O(1) values.
    w1m, w2m = w1 * 100.0, w2 * 100.0
    out2 = jax.block_until_ready(
        actor_net_forward(states, w1m, b1, w2m, b2, action_bound_high)
    )
    assert jnp.allclose(out2, ref_fwd(states, w1m, b1, w2m, b2), atol=2e-3, rtol=2e-3)

    # 3) Batched path: tiles over B (incl. a ragged tail), weights resident,
    #    parallel batch axis.
    big_states = jax.random.normal(k_big, (544, state_dim), dtype=jnp.float32)
    out3 = jax.block_until_ready(
        actor_net_forward(big_states, w1m, b1, w2m, b2, action_bound_high, block_b=256)
    )
    assert out3.shape == (544, action_dim)
    assert jnp.allclose(
        out3, ref_fwd(big_states, w1m, b1, w2m, b2), atol=2e-3, rtol=2e-3
    )

    print("KERNEL_OK")
</pallas_src>

<mosaic_0001>
module attributes {stable_mosaic.version = 11 : i64} {
  func.func @_actor_kernel(%arg0: memref<2x16xf32, #tpu.memory_space<vmem>>, %arg1: memref<16x384xf32, #tpu.memory_space<vmem>>, %arg2: memref<1x384xf32, #tpu.memory_space<vmem>>, %arg3: memref<384x4xf32, #tpu.memory_space<vmem>>, %arg4: memref<1x4xf32, #tpu.memory_space<vmem>>, %arg5: memref<2x4xf32, #tpu.memory_space<vmem>>) attributes {dimension_semantics = [], scalar_prefetch = 0 : i64, scratch_operands = 0 : i64, tpu.core_type = #tpu.core_type<tc>} {
    %c0 = arith.constant 0 : index
    %c0_0 = arith.constant 0 : index
    %0 = vector.load %arg0[%c0, %c0_0] : memref<2x16xf32, #tpu.memory_space<vmem>>, vector<2x16xf32>
    %c0_1 = arith.constant 0 : index
    %c0_2 = arith.constant 0 : index
    %1 = vector.load %arg1[%c0_1, %c0_2] : memref<16x384xf32, #tpu.memory_space<vmem>>, vector<16x384xf32>
    %cst = arith.constant dense<0.000000e+00> : vector<2x384xf32>
    %2 = tpu.matmul %0, %1, %cst {dimension_numbers = #tpu.dot_dimension_numbers<[1], [0], [0], [1], [0, 0, 1, 1], [], []>} : vector<2x16xf32>, vector<16x384xf32>, vector<2x384xf32> -> vector<2x384xf32>
    %c0_3 = arith.constant 0 : index
    %c0_4 = arith.constant 0 : index
    %3 = vector.load %arg2[%c0_3, %c0_4] : memref<1x384xf32, #tpu.memory_space<vmem>>, vector<1x384xf32>
    %4 = vector.broadcast %3 : vector<1x384xf32> to vector<2x384xf32>
    %5 = arith.addf %2, %4 : vector<2x384xf32>
    %cst_5 = arith.constant 0.000000e+00 : f32
    %6 = vector.broadcast %cst_5 : f32 to vector<2x384xf32>
    %7 = arith.maximumf %5, %6 : vector<2x384xf32>
    %c0_6 = arith.constant 0 : index
    %c0_7 = arith.constant 0 : index
    %8 = vector.load %arg3[%c0_6, %c0_7] : memref<384x4xf32, #tpu.memory_space<vmem>>, vector<384x4xf32>
    %cst_8 = arith.constant dense<0.000000e+00> : vector<2x4xf32>
    %9 = tpu.matmul %7, %8, %cst_8 {dimension_numbers = #tpu.dot_dimension_numbers<[1], [0], [0], [1], [0, 0, 1, 1], [], []>} : vector<2x384xf32>, vector<384x4xf32>, vector<2x4xf32> -> vector<2x4xf32>
    %c0_9 = arith.constant 0 : index
    %c0_10 = arith.constant 0 : index
    %10 = vector.load %arg4[%c0_9, %c0_10] : memref<1x4xf32, #tpu.memory_space<vmem>>, vector<1x4xf32>
    %11 = vector.broadcast %10 : vector<1x4xf32> to vector<2x4xf32>
    %12 = arith.addf %9, %11 : vector<2x4xf32>
    %13 = math.tanh %12 : vector<2x4xf32>
    %cst_11 = arith.constant 2.000000e+00 : f32
    %14 = vector.broadcast %cst_11 : f32 to vector<2x4xf32>
    %15 = arith.mulf %13, %14 : vector<2x4xf32>
    %c0_12 = arith.constant 0 : index
    %c0_13 = arith.constant 0 : index
    %16 = vector.load %arg5[%c0_12, %c0_13] : memref<2x4xf32, #tpu.memory_space<vmem>>, vector<2x4xf32>
    tpu.vector_store %arg5[%c0_12, %c0_13], %15 {strides = array<i32>} : memref<2x4xf32, #tpu.memory_space<vmem>>, vector<2x4xf32>,
    return
  }
}

</mosaic_0001>

<llo_original>
// kernel: tpu_custom_call.1
$region0: #{tpu_custom_call.1}
  #allocation0 [shape = 'u32[]', space=smem, size = 0x4, offset = 0x4, fixed_abs, tag = 'smem constant byte address 0x4 - core index']
  #allocation1 [shape = 'u32[144,128]{1,0:T(1,128)}', space=vmem, size = 0x12000, scoped, tag = 'internal scratch']
  %s0 = inlined_call_operand.vmem [shape: f32[2,16], index: 0, kind: input, shape index: {}]
  %s1 = inlined_call_operand.vmem [shape: f32[16,384], index: 1, kind: input, shape index: {}]
  %s2 = inlined_call_operand.vmem [shape: f32[1,384], index: 2, kind: input, shape index: {}]
  %s3 = inlined_call_operand.vmem [shape: f32[384,4], index: 3, kind: input, shape index: {}]
  %s4 = inlined_call_operand.vmem [shape: f32[1,4], index: 4, kind: input, shape index: {}]
  %s5 = inlined_call_operand.hbm [shape: f32[2,4], index: 5, kind: output, shape index: {}]
  %s6 = sld [smem:[#allocation0]]
  $region30: #{tpu_custom_call.1} parent=0
    _
  %s8 = ssub.s32 1, %s6
  %s9 = scalar_select 0, %s8, %s6
  $region1: #{tpu_custom_call.1} parent=0
    #allocation2 [shape = 'u8[1024]{0}', space=vmem, size = 0x400, scoped, tag = 'output window, operand 0, single buffered']
    #allocation3 [shape = 's32[1]{0}', space=sflag, size = 0x4, scoped, tag = 'scoped memory for tpu_custom_call.1']
    %10 = vsyncpa [#allocation3], 0
    // Predicated region
    $region2: #{tpu_custom_call.1} parent=1 // pred_check
      _
    $region3: #{tpu_custom_call.1} parent=1 // pred_check_branch
      %12 = sbr.rel (0) target = $region5
    $region4: #{tpu_custom_call.1} parent=1 // pred_region
      _
    $region5: #{tpu_custom_call.1} parent=1 // pred_fallthru
      _
    // Predicated region
    $region6: #{tpu_custom_call.1} parent=1 // pred_check
      _
    $region7: #{tpu_custom_call.1} parent=1 // pred_check_branch
      %14 = sbr.rel (0) target = $region9
    $region8: #{tpu_custom_call.1} parent=1 // pred_region
      _
    $region9: #{tpu_custom_call.1} parent=1 // pred_fallthru
      _
    // Predicated region
    $region10: #{tpu_custom_call.1} parent=1 // pred_check
      _
    $region11: #{tpu_custom_call.1} parent=1 // pred_check_branch
      %16 = sbr.rel (0) target = $region13
    $region12: #{tpu_custom_call.1} parent=1 // pred_region
      _
    $region13: #{tpu_custom_call.1} parent=1 // pred_fallthru
      _
    // Predicated region
    $region14: #{tpu_custom_call.1} parent=1 // pred_check
      _
    $region15: #{tpu_custom_call.1} parent=1 // pred_check_branch
      %18 = sbr.rel (0) target = $region17
    $region16: #{tpu_custom_call.1} parent=1 // pred_region
      _
    $region17: #{tpu_custom_call.1} parent=1 // pred_fallthru
      _
    // Predicated region
    $region18: #{tpu_custom_call.1} parent=1 // pred_check
      _
    $region19: #{tpu_custom_call.1} parent=1 // pred_check_branch
      %20 = sbr.rel (0) target = $region21
    $region20: #{tpu_custom_call.1} parent=1 // pred_region
      _
    $region21: #{tpu_custom_call.1} parent=1 // pred_fallthru
      _
    %v21 = vld [vmem:[%s0] sm:$0x3]
    %v22 = vld [vmem:[%s1] sm:$0xff]
    %v23 = vld [vmem:[%s1 + $0x8] sm:$0xff]
    %v24 = vld [vmem:[%s1 + $0x10] sm:$0xff]
    %v25 = vld [vmem:[%s1 + $0x18] sm:$0xff]
    %v26 = vld [vmem:[%s1 + $0x20] sm:$0xff]
    %v27 = vld [vmem:[%s1 + $0x28] sm:$0xff]
    %v28 = vld [vmem:[%s2] sm:$0x7]
    %v30 = vlaneseq
    %v31 = vshrl.u32 %v30, 7
    %v32 = vsub.s32 0, %v31
    %v33 = vrot.slane %v28, %v32
    %v34 = vlaneseq
    %v35 = vshrl.u32 %v34, 7
    %v36 = vsub.s32 1, %v35
    %v37 = vrot.slane %v28, %v36
    %v38 = vlaneseq
    %v39 = vshrl.u32 %v38, 7
    %v40 = vsub.s32 2, %v39
    %v41 = vrot.slane %v28, %v40
    %vm45 = vcmask 130048
    %v47 = vsel %vm45, %v21, 0
    %49 = vmatprep.subr.mxu0 %v23
    %50 = vmatpush1.msra.mxu0 %v22
    %51 = vmatprep.subr.mxu0 %v26
    %52 = vmatpush1.msra.mxu0 %v25
    %53 = vmatprep.subr.mxu0 0.0
    %54 = vmatpush1.msra.mxu0 0.0
    %55 = vmatprep.subr.mxu0 0.0
    %56 = vmatpush1.msra.mxu0 0.0
    %57 = vmatprep.subr.mxu0 0.0
    %58 = vmatpush1.msra.mxu0 0.0
    %59 = vmatprep.subr.mxu0 0.0
    %60 = vmatpush1.msra.mxu0 0.0
    %61 = vmatprep.subr.mxu0 0.0
    %62 = vmatpush1.msra.mxu0 0.0
    %63 = vmatprep.subr.mxu0 0.0
    %64 = vmatpush1.msra.mxu0 0.0
    %65 = vmatprep.subr.mxu0 0.0
    %66 = vmatpush1.msra.mxu0 0.0
    %67 = vmatprep.subr.mxu0 0.0
    %68 = vmatpush1.msra.mxu0 0.0
    %69 = vmatprep.subr.mxu0 0.0
    %70 = vmatpush1.msra.mxu0 0.0
    %71 = vmatprep.subr.mxu0 0.0
    %72 = vmatpush1.msra.mxu0 0.0
    %73 = vmatprep.subr.mxu0 0.0
    %74 = vmatpush1.msra.mxu0 0.0
    %75 = vmatprep.subr.mxu0 0.0
    %76 = vmatpush1.msra.mxu0 0.0
    %77 = vmatprep.subr.mxu0 0.0
    %78 = vmatpush1.msra.mxu0 0.0
    %79 = vmatprep.subr.mxu0 0.0
    %80 = vmatpush1.msra.mxu0 0.0
    %81 = vmatprep.subr.mxu0 0.0
    %82 = vmatpush1.msra.mxu0 0.0
    %83 = vmatprep.subr.mxu0 0.0
    %84 = vmatpush1.msra.mxu0 0.0
    %85 = vmatprep.subr.mxu0 0.0
    %86 = vmatpush1.msra.mxu0 0.0
    %87 = vmatprep.subr.mxu0 0.0
    %88 = vmatpush1.msra.mxu0 0.0
    %89 = vmatprep.subr.mxu0 0.0
    %90 = vmatpush1.msra.mxu0 0.0
    %91 = vmatprep.subr.mxu0 0.0
    %92 = vmatpush1.msra.mxu0 0.0
    %93 = vmatprep.subr.mxu0 0.0
    %94 = vmatpush1.msra.mxu0 0.0
    %95 = vmatprep.subr.mxu0 0.0
    %96 = vmatpush1.msra.mxu0 0.0
    %97 = vmatprep.subr.mxu0 0.0
    %98 = vmatpush1.msra.mxu0 0.0
    %99 = vmatprep.subr.mxu0 0.0
    %100 = vmatpush1.msra.mxu0 0.0
    %101 = vmatprep.subr.mxu0 0.0
    %102 = vmatpush1.msra.mxu0 0.0
    %103 = vmatprep.subr.mxu0 0.0
    %104 = vmatpush1.msra.mxu0 0.0
    %105 = vmatprep.subr.mxu0 0.0
    %106 = vmatpush1.msra.mxu0 0.0
    %107 = vmatprep.subr.mxu0 0.0
    %108 = vmatpush1.msra.mxu0 0.0
    %109 = vmatprep.subr.mxu0 0.0
    %110 = vmatpush1.msra.mxu0 0.0
    %111 = vmatprep.subr.mxu0 0.0
    %112 = vmatpush1.msra.mxu0 0.0
    %113 = vmatprep.mubr.f32.mxu0 0.0
    %114 = vmatmul.mubr.f32.gmra.mrb[0].mxu0 %v47
    %v115 = vpop.f32.mrb[0].mxu0
    %v116 = vadd.f32 %v33, %v115
    %v117 = vpop.f32.mrb[0].mxu0
    %v118 = vadd.f32 %v37, %v117
    %119 = vdwg.mxu0
    %120 = vmatprep.subr.mxu0 0.0
    %121 = vmatpush1.msra.mxu0 %v24
    %122 = vmatprep.subr.mxu0 0.0
    %123 = vmatpush1.msra.mxu0 %v27
    %124 = vmatprep.subr.mxu0 0.0
    %125 = vmatpush1.msra.mxu0 0.0
    %126 = vmatprep.subr.mxu0 0.0
    %127 = vmatpush1.msra.mxu0 0.0
    %128 = vmatprep.subr.mxu0 0.0
    %129 = vmatpush1.msra.mxu0 0.0
    %130 = vmatprep.subr.mxu0 0.0
    %131 = vmatpush1.msra.mxu0 0.0
    %132 = vmatprep.subr.mxu0 0.0
    %133 = vmatpush1.msra.mxu0 0.0
    %134 = vmatprep.subr.mxu0 0.0
    %135 = vmatpush1.msra.mxu0 0.0
    %136 = vmatprep.subr.mxu0 0.0
    %137 = vmatpush1.msra.mxu0 0.0
    %138 = vmatprep.subr.mxu0 0.0
    %139 = vmatpush1.msra.mxu0 0.0
    %140 = vmatprep.subr.mxu0 0.0
    %141 = vmatpush1.msra.mxu0 0.0
    %142 = vmatprep.subr.mxu0 0.0
    %143 = vmatpush1.msra.mxu0 0.0
    %144 = vmatprep.subr.mxu0 0.0
    %145 = vmatpush1.msra.mxu0 0.0
    %146 = vmatprep.subr.mxu0 0.0
    %147 = vmatpush1.msra.mxu0 0.0
    %148 = vmatprep.subr.mxu0 0.0
    %149 = vmatpush1.msra.mxu0 0.0
    %150 = vmatprep.subr.mxu0 0.0
    %151 = vmatpush1.msra.mxu0 0.0
    %152 = vmatprep.subr.mxu0 0.0
    %153 = vmatpush1.msra.mxu0 0.0
    %154 = vmatprep.subr.mxu0 0.0
    %155 = vmatpush1.msra.mxu0 0.0
    %156 = vmatprep.subr.mxu0 0.0
    %157 = vmatpush1.msra.mxu0 0.0
    %158 = vmatprep.subr.mxu0 0.0
    %159 = vmatpush1.msra.mxu0 0.0
    %160 = vmatprep.subr.mxu0 0.0
    %161 = vmatpush1.msra.mxu0 0.0
    %162 = vmatprep.subr.mxu0 0.0
    %163 = vmatpush1.msra.mxu0 0.0
    %164 = vmatprep.subr.mxu0 0.0
    %165 = vmatpush1.msra.mxu0 0.0
    %166 = vmatprep.subr.mxu0 0.0
    %167 = vmatpush1.msra.mxu0 0.0
    %168 = vmatprep.subr.mxu0 0.0
    %169 = vmatpush1.msra.mxu0 0.0
    %170 = vmatprep.subr.mxu0 0.0
    %171 = vmatpush1.msra.mxu0 0.0
    %172 = vmatprep.subr.mxu0 0.0
    %173 = vmatpush1.msra.mxu0 0.0
    %174 = vmatprep.subr.mxu0 0.0
    %175 = vmatpush1.msra.mxu0 0.0
    %176 = vmatprep.subr.mxu0 0.0
    %177 = vmatpush1.msra.mxu0 0.0
    %178 = vmatprep.subr.mxu0 0.0
    %179 = vmatpush1.msra.mxu0 0.0
    %180 = vmatprep.subr.mxu0 0.0
    %181 = vmatpush1.msra.mxu0 0.0
    %182 = vmatprep.subr.mxu0 0.0
    %183 = vmatpush1.msra.mxu0 0.0
    %184 = vmatprep.mubr.f32.mxu0 0.0
    %185 = vmatmul.mubr.f32.gmra.mrb[0].mxu0 %v47
    %v186 = vpop.f32.mrb[0].mxu0
    %v187 = vadd.f32 %v41, %v186
    %v188 = vpop.f32.mrb[0].mxu0
    %189 = vdwg.mxu0
    %v190 = vmax.f32 %v116, 0.0
    %v191 = vmax.f32 %v118, 0.0
    %v192 = vmax.f32 %v187, 0.0
    %v193 = vld [vmem:[%s3] sm:$0xff]
    %v194 = vld [vmem:[%s3 + $0x8] sm:$0xff]
    %v195 = vld [vmem:[%s3 + $0x10] sm:$0xff]
    %v196 = vld [vmem:[%s3 + $0x18] sm:$0xff]
    %v197 = vld [vmem:[%s3 + $0x20] sm:$0xff]
    %v198 = vld [vmem:[%s3 + $0x28] sm:$0xff]
    %v199 = vld [vmem:[%s3 + $0x30] sm:$0xff]
    %v200 = vld [vmem:[%s3 + $0x38] sm:$0xff]
    %v201 = vld [vmem:[%s3 + $0x40] sm:$0xff]
    %v202 = vld [vmem:[%s3 + $0x48] sm:$0xff]
    %v203 = vld [vmem:[%s3 + $0x50] sm:$0xff]
    %v204 = vld [vmem:[%s3 + $0x58] sm:$0xff]
    %v205 = vld [vmem:[%s3 + $0x60] sm:$0xff]
    %v206 = vld [vmem:[%s3 + $0x68] sm:$0xff]
    %v207 = vld [vmem:[%s3 + $0x70] sm:$0xff]
    %v208 = vld [vmem:[%s3 + $0x78] sm:$0xff]
    %v209 = vld [vmem:[%s3 + $0x80] sm:$0xff]
    %v210 = vld [vmem:[%s3 + $0x88] sm:$0xff]
    %v211 = vld [vmem:[%s3 + $0x90] sm:$0xff]
    %v212 = vld [vmem:[%s3 + $0x98] sm:$0xff]
    %v213 = vld [vmem:[%s3 + $0xa0] sm:$0xff]
    %v214 = vld [vmem:[%s3 + $0xa8] sm:$0xff]
    %v215 = vld [vmem:[%s3 + $0xb0] sm:$0xff]
    %v216 = vld [vmem:[%s3 + $0xb8] sm:$0xff]
    %v217 = vld [vmem:[%s3 + $0xc0] sm:$0xff]
    %v218 = vld [vmem:[%s3 + $0xc8] sm:$0xff]
    %v219 = vld [vmem:[%s3 + $0xd0] sm:$0xff]
    %v220 = vld [vmem:[%s3 + $0xd8] sm:$0xff]
    %v221 = vld [vmem:[%s3 + $0xe0] sm:$0xff]
    %v222 = vld [vmem:[%s3 + $0xe8] sm:$0xff]
    %v223 = vld [vmem:[%s3 + $0xf0] sm:$0xff]
    %v224 = vld [vmem:[%s3 + $0xf8] sm:$0xff]
    %v225 = vld [vmem:[%s3 + $0x100] sm:$0xff]
    %v226 = vld [vmem:[%s3 + $0x108] sm:$0xff]
    %v227 = vld [vmem:[%s3 + $0x110] sm:$0xff]
    %v228 = vld [vmem:[%s3 + $0x118] sm:$0xff]
    %v229 = vld [vmem:[%s3 + $0x120] sm:$0xff]
    %v230 = vld [vmem:[%s3 + $0x128] sm:$0xff]
    %v231 = vld [vmem:[%s3 + $0x130] sm:$0xff]
    %v232 = vld [vmem:[%s3 + $0x138] sm:$0xff]
    %v233 = vld [vmem:[%s3 + $0x140] sm:$0xff]
    %v234 = vld [vmem:[%s3 + $0x148] sm:$0xff]
    %v235 = vld [vmem:[%s3 + $0x150] sm:$0xff]
    %v236 = vld [vmem:[%s3 + $0x158] sm:$0xff]
    %v237 = vld [vmem:[%s3 + $0x160] sm:$0xff]
    %v238 = vld [vmem:[%s3 + $0x168] sm:$0xff]
    %v239 = vld [vmem:[%s3 + $0x170] sm:$0xff]
    %v240 = vld [vmem:[%s3 + $0x178] sm:$0xff]
    %v241 = vld [vmem:[%s4] sm:$0x1]
    %v243 = vlaneseq
    %v244 = vshrl.u32 %v243, 7
    %v245 = vsub.s32 0, %v244
    %v246 = vrot.slane %v241, %v245
    %248 = vmatprep.subr.mxu0 0.0
    %249 = vmatpush1.msra.mxu0 %v193
    %250 = vmatprep.subr.mxu0 0.0
    %251 = vmatpush1.msra.mxu0 %v194
    %252 = vmatprep.subr.mxu0 0.0
    %253 = vmatpush1.msra.mxu0 %v195
    %254 = vmatprep.subr.mxu0 0.0
    %255 = vmatpush1.msra.mxu0 %v196
    %256 = vmatprep.subr.mxu0 0.0
    %257 = vmatpush1.msra.mxu0 %v197
    %258 = vmatprep.subr.mxu0 0.0
    %259 = vmatpush1.msra.mxu0 %v198
    %260 = vmatprep.subr.mxu0 0.0
    %261 = vmatpush1.msra.mxu0 %v199
    %262 = vmatprep.subr.mxu0 0.0
    %263 = vmatpush1.msra.mxu0 %v200
    %264 = vmatprep.subr.mxu0 0.0
    %265 = vmatpush1.msra.mxu0 %v201
    %266 = vmatprep.subr.mxu0 0.0
    %267 = vmatpush1.msra.mxu0 %v202
    %268 = vmatprep.subr.mxu0 0.0
    %269 = vmatpush1.msra.mxu0 %v203
    %270 = vmatprep.subr.mxu0 0.0
    %271 = vmatpush1.msra.mxu0 %v204
    %272 = vmatprep.subr.mxu0 0.0
    %273 = vmatpush1.msra.mxu0 %v205
    %274 = vmatprep.subr.mxu0 0.0
    %275 = vmatpush1.msra.mxu0 %v206
    %276 = vmatprep.subr.mxu0 0.0
    %277 = vmatpush1.msra.mxu0 %v207
    %278 = vmatprep.subr.mxu0 0.0
    %279 = vmatpush1.msra.mxu0 %v208
    %280 = vmatprep.subr.mxu0 0.0
    %281 = vmatpush1.msra.mxu0 %v209
    %282 = vmatprep.subr.mxu0 0.0
    %283 = vmatpush1.msra.mxu0 %v210
    %284 = vmatprep.subr.mxu0 0.0
    %285 = vmatpush1.msra.mxu0 %v211
    %286 = vmatprep.subr.mxu0 0.0
    %287 = vmatpush1.msra.mxu0 %v212
    %288 = vmatprep.subr.mxu0 0.0
    %289 = vmatpush1.msra.mxu0 %v213
    %290 = vmatprep.subr.mxu0 0.0
    %291 = vmatpush1.msra.mxu0 %v214
    %292 = vmatprep.subr.mxu0 0.0
    %293 = vmatpush1.msra.mxu0 %v215
    %294 = vmatprep.subr.mxu0 0.0
    %295 = vmatpush1.msra.mxu0 %v216
    %296 = vmatprep.subr.mxu0 0.0
    %297 = vmatpush1.msra.mxu0 %v217
    %298 = vmatprep.subr.mxu0 0.0
    %299 = vmatpush1.msra.mxu0 %v218
    %300 = vmatprep.subr.mxu0 0.0
    %301 = vmatpush1.msra.mxu0 %v219
    %302 = vmatprep.subr.mxu0 0.0
    %303 = vmatpush1.msra.mxu0 %v220
    %304 = vmatprep.subr.mxu0 0.0
    %305 = vmatpush1.msra.mxu0 %v221
    %306 = vmatprep.subr.mxu0 0.0
    %307 = vmatpush1.msra.mxu0 %v222
    %308 = vmatprep.subr.mxu0 0.0
    %309 = vmatpush1.msra.mxu0 %v223
    %310 = vmatprep.subr.mxu0 0.0
    %311 = vmatpush1.msra.mxu0 %v224
    %312 = vmatprep.mubr.f32.mxu0 %v191
    %313 = vmatmul.mubr.f32.gmra.mrb[0].mxu0 %v190
    %v314 = vpop.f32.mrb[0].mxu0
    %v315 = vadd.f32 %v246, %v314
    %v316 = vpop.f32.mrb[0].mxu0
    %317 = vdwg.mxu0
    %318 = vmatprep.subr.mxu0 0.0
    %319 = vmatpush1.msra.mxu0 %v225
    %320 = vmatprep.subr.mxu0 0.0
    %321 = vmatpush1.msra.mxu0 %v226
    %322 = vmatprep.subr.mxu0 0.0
    %323 = vmatpush1.msra.mxu0 %v227
    %324 = vmatprep.subr.mxu0 0.0
    %325 = vmatpush1.msra.mxu0 %v228
    %326 = vmatprep.subr.mxu0 0.0
    %327 = vmatpush1.msra.mxu0 %v229
    %328 = vmatprep.subr.mxu0 0.0
    %329 = vmatpush1.msra.mxu0 %v230
    %330 = vmatprep.subr.mxu0 0.0
    %331 = vmatpush1.msra.mxu0 %v231
    %332 = vmatprep.subr.mxu0 0.0
    %333 = vmatpush1.msra.mxu0 %v232
    %334 = vmatprep.subr.mxu0 0.0
    %335 = vmatpush1.msra.mxu0 %v233
    %336 = vmatprep.subr.mxu0 0.0
    %337 = vmatpush1.msra.mxu0 %v234
    %338 = vmatprep.subr.mxu0 0.0
    %339 = vmatpush1.msra.mxu0 %v235
    %340 = vmatprep.subr.mxu0 0.0
    %341 = vmatpush1.msra.mxu0 %v236
    %342 = vmatprep.subr.mxu0 0.0
    %343 = vmatpush1.msra.mxu0 %v237
    %344 = vmatprep.subr.mxu0 0.0
    %345 = vmatpush1.msra.mxu0 %v238
    %346 = vmatprep.subr.mxu0 0.0
    %347 = vmatpush1.msra.mxu0 %v239
    %348 = vmatprep.subr.mxu0 0.0
    %349 = vmatpush1.msra.mxu0 %v240
    %350 = vmatprep.subr.mxu0 0.0
    %351 = vmatpush1.msra.mxu0 0.0
    %352 = vmatprep.subr.mxu0 0.0
    %353 = vmatpush1.msra.mxu0 0.0
    %354 = vmatprep.subr.mxu0 0.0
    %355 = vmatpush1.msra.mxu0 0.0
    %356 = vmatprep.subr.mxu0 0.0
    %357 = vmatpush1.msra.mxu0 0.0
    %358 = vmatprep.subr.mxu0 0.0
    %359 = vmatpush1.msra.mxu0 0.0
    %360 = vmatprep.subr.mxu0 0.0
    %361 = vmatpush1.msra.mxu0 0.0
    %362 = vmatprep.subr.mxu0 0.0
    %363 = vmatpush1.msra.mxu0 0.0
    %364 = vmatprep.subr.mxu0 0.0
    %365 = vmatpush1.msra.mxu0 0.0
    %366 = vmatprep.subr.mxu0 0.0
    %367 = vmatpush1.msra.mxu0 0.0
    %368 = vmatprep.subr.mxu0 0.0
    %369 = vmatpush1.msra.mxu0 0.0
    %370 = vmatprep.subr.mxu0 0.0
    %371 = vmatpush1.msra.mxu0 0.0
    %372 = vmatprep.subr.mxu0 0.0
    %373 = vmatpush1.msra.mxu0 0.0
    %374 = vmatprep.subr.mxu0 0.0
    %375 = vmatpush1.msra.mxu0 0.0
    %376 = vmatprep.subr.mxu0 0.0
    %377 = vmatpush1.msra.mxu0 0.0
    %378 = vmatprep.subr.mxu0 0.0
    %379 = vmatpush1.msra.mxu0 0.0
    %380 = vmatprep.subr.mxu0 0.0
    %381 = vmatpush1.msra.mxu0 0.0
    %382 = vmatprep.mubr.f32.mxu0 0.0
    %383 = vmatmul.mubr.f32.gmra.mrb[0].mxu0 %v192
    %v384 = vpop.f32.mrb[0].mxu0
    %v385 = vadd.f32 %v315, %v384
    %v386 = vpop.f32.mrb[0].mxu0
    %387 = vdwg.mxu0
    %v388 = vtanh.pop %v385
    %v389 = vmul.f32 %v388, 2.0
    %vm390 = vcmask 25600
    %391 = vst.msk [vmem:[#allocation2] sm:$0x3] %vm390, %v389
    // Predicated region
    $region22: #{tpu_custom_call.1} parent=1 // pred_check
      _
    $region23: #{tpu_custom_call.1} parent=1 // pred_check_branch
      %393 = sbr.rel (0) target = $region25
    $region24: #{tpu_custom_call.1} parent=1 // pred_region
      %s395 = ssub.s32 32, 32
      %396 = vsyncadd [#allocation3], %s395
      %s398 = sshll.u32 [#allocation2], 4
      %s399 = int_to_ptr.vmem [resolvable:$true] %s398
      %401 = dma.vmem_to_hbm [thread:$0]  %s399, 32, %s5, [#allocation3]
    $region25: #{tpu_custom_call.1} parent=1 // pred_fallthru
      _
    // Predicated region
    $region26: #{tpu_custom_call.1} parent=1 // pred_check
      _
    $region27: #{tpu_custom_call.1} parent=1 // pred_check_branch
      %403 = sbr.rel (0) target = $region29
    $region28: #{tpu_custom_call.1} parent=1 // pred_region
      %404 = dma.done [#allocation3], 32
    $region29: #{tpu_custom_call.1} parent=1 // pred_fallthru
      _
    %405 = vsyncpa [#allocation3], 1

</llo_original>
